<compile_context>
chip_gen: v6e
topology: v6e:2x2x1
jax: 0.10.0
libtpu: 0.0.40
codegen_flags: <defaults>
</compile_context>

<pallas_src>
import jax
import jax.numpy as jnp
from jax.experimental import pallas as pl
from jax.experimental.pallas import tpu as pltpu


def _round_up(x, m):
    return ((x + m - 1) // m) * m


# ----------------------------------------------------------------- kernels --

def _block_kernel_residual(x_ref, wt_ref, b_ref, pt_ref, o_ref):
    x = x_ref[...]
    # Linear (weights pre-transposed in the wrapper): x @ W^T + b, f32 acc.
    h = jnp.dot(x, wt_ref[...], preferred_element_type=jnp.float32)
    h = jnp.maximum(h + b_ref[...], 0.0)                 # bias + ReLU in f32
    # Proj: h @ P^T, then residual add (both in f32).
    o = jnp.dot(h.astype(pt_ref.dtype), pt_ref[...],
                preferred_element_type=jnp.float32)
    o_ref[...] = (o + x.astype(jnp.float32)).astype(o_ref.dtype)


def _block_kernel_plain(x_ref, wt_ref, b_ref, o_ref):
    x = x_ref[...]
    h = jnp.dot(x, wt_ref[...], preferred_element_type=jnp.float32)
    o_ref[...] = jnp.maximum(h + b_ref[...], 0.0).astype(o_ref.dtype)


# ----------------------------------------------------------------- wrapper --

def _build_call(*, residual, Np, Dp, tm, out_dtype, single_buffer, vmem_limit):
    grid = (Np // tm,)
    row_spec = pl.BlockSpec((tm, Dp), lambda i: (i, 0))
    if single_buffer:
        # Constant index_map -> block never changes; single-buffer it so the
        # resident weights don't cost 2x VMEM.
        w_spec = pl.BlockSpec((Dp, Dp), lambda i: (0, 0),
                              pipeline_mode=pl.Buffered(1))
        b_spec = pl.BlockSpec((1, Dp), lambda i: (0, 0),
                              pipeline_mode=pl.Buffered(1))
    else:
        w_spec = pl.BlockSpec((Dp, Dp), lambda i: (0, 0))
        b_spec = pl.BlockSpec((1, Dp), lambda i: (0, 0))

    if residual:
        kernel = _block_kernel_residual
        in_specs = [row_spec, w_spec, b_spec, w_spec]
    else:
        kernel = _block_kernel_plain
        in_specs = [row_spec, w_spec, b_spec]

    return pl.pallas_call(
        kernel,
        out_shape=jax.ShapeDtypeStruct((Np, Dp), out_dtype),
        grid_spec=pltpu.PrefetchScalarGridSpec(
            num_scalar_prefetch=0,
            grid=grid,
            in_specs=in_specs,
            out_specs=row_spec,
        ),
        compiler_params=pltpu.CompilerParams(
            dimension_semantics=("parallel",),
            vmem_limit_bytes=vmem_limit,
        ),
    )


def block_forward(x, w, b, p=None, *, residual=True, tm=512, compute_dtype=None):
    """Fused Block forward.

    x: (N, D); w: (D, D) torch layout (out_dim, in_dim); b: (D,); p: (D, D).
    compute_dtype: optional matmul dtype (e.g. jnp.bfloat16). Accumulation is
      always f32 and bias / ReLU / residual are done in f32.
    """
    N, D = x.shape
    out_dtype = x.dtype
    cdt = jnp.dtype(compute_dtype) if compute_dtype is not None else jnp.dtype(x.dtype)

    # Pad lanes to a multiple of 128 (lane-dense stores, full MXU K/N) and rows
    # to a multiple of the effective row tile (sublane-aligned).
    sublane = 16 if cdt == jnp.dtype(jnp.bfloat16) else 8
    Dp = _round_up(D, 128)
    tm_eff = _round_up(min(tm, _round_up(N, sublane)), sublane)
    Np = _round_up(N, tm_eff)

    xp = x
    if (Np, Dp) != (N, D):
        xp = jnp.pad(x, ((0, Np - N), (0, Dp - D)))
    xp = xp.astype(cdt)

    def _prep_weight(m):
        if Dp != D:
            m = jnp.pad(m, ((0, Dp - D), (0, Dp - D)))
        return m.T.astype(cdt)          # pre-transpose once: contraction-ready

    wT = _prep_weight(w)
    bp = b if Dp == D else jnp.pad(b, (0, Dp - D))
    b2 = bp.reshape(1, Dp).astype(jnp.float32)

    args = [xp, wT, b2]
    n_weights = 1
    if residual:
        assert p is not None, "residual=True requires the projection matrix"
        args.append(_prep_weight(p))
        n_weights = 2

    # VMEM plan: only raise the scoped limit when resident weights + the
    # double-buffered row tiles would exceed the ~32 MiB default.
    w_item = cdt.itemsize
    est = (n_weights * Dp * Dp * w_item                                   # weights (single-buffered)
           + 2 * tm_eff * Dp * (w_item + jnp.dtype(out_dtype).itemsize)   # x / out double-buffered
           + 2 * Dp * 4)                                                  # bias
    vmem_limit = None
    if est > (30 << 20):
        vmem_limit = min(int(est * 1.5), 100 << 20)

    try:
        out = _build_call(residual=residual, Np=Np, Dp=Dp, tm=tm_eff,
                          out_dtype=out_dtype, single_buffer=True,
                          vmem_limit=vmem_limit)(*args)
    except Exception:
        # Fallback: default (double) buffering for the constant weight blocks.
        out = _build_call(residual=residual, Np=Np, Dp=Dp, tm=tm_eff,
                          out_dtype=out_dtype, single_buffer=False,
                          vmem_limit=vmem_limit)(*args)

    if (Np, Dp) != (N, D):
        out = out[:N, :D]
    return out


def block_forward_ref(x, w, b, p=None, *, residual=True):
    """Pure-JAX reference for correctness check."""
    out = jnp.maximum(x @ w.T + b, 0.0)
    if residual:
        out = out @ p.T + x
    return out


if __name__ == "__main__":
    key = jax.random.PRNGKey(0)
    k_x, k_w, k_b, k_p = jax.random.split(key, 4)

    N, D = 8, 32  # small shapes: 8 rows (batch*seq), hidden dim 32
    x = jax.random.normal(k_x, (N, D), dtype=jnp.float32)

    # Deterministic parameter init (module's weights/buffers are synthetic).
    w = jax.random.normal(k_w, (D, D), dtype=jnp.float32) * 0.1  # linear.weight
    b = jax.random.normal(k_b, (D,), dtype=jnp.float32) * 0.1    # linear.bias
    p = jax.random.normal(k_p, (D, D), dtype=jnp.float32) * 0.1  # proj.matrix

    ref_res = block_forward_ref(x, w, b, p, residual=True)
    ref_plain = block_forward_ref(x, w, b, residual=False)

    # residual = True path (f32 compute)
    out_res = block_forward(x, w, b, p, residual=True)
    jax.block_until_ready(out_res)
    assert out_res.shape == (N, D)
    assert jnp.allclose(out_res, ref_res, atol=1e-5, rtol=1e-5)

    # residual = False path (f32 compute)
    out_plain = block_forward(x, w, b, residual=False)
    jax.block_until_ready(out_plain)
    assert jnp.allclose(out_plain, ref_plain, atol=1e-5, rtol=1e-5)

    # bf16 matmul path (f32 accumulation + f32 bias/ReLU/residual)
    out_bf16 = block_forward(x, w, b, p, residual=True,
                             compute_dtype=jnp.bfloat16)
    jax.block_until_ready(out_bf16)
    assert jnp.allclose(out_bf16, ref_res, atol=5e-2, rtol=5e-2)

    print("KERNEL_OK")
</pallas_src>

<mosaic_0001>
module attributes {stable_mosaic.version = 11 : i64} {
  func.func @_block_kernel_residual(%arg0: i32, %arg1: memref<8x128xf32, #tpu.memory_space<vmem>>, %arg2: memref<128x128xf32, #tpu.memory_space<vmem>>, %arg3: memref<1x128xf32, #tpu.memory_space<vmem>>, %arg4: memref<128x128xf32, #tpu.memory_space<vmem>>, %arg5: memref<8x128xf32, #tpu.memory_space<vmem>>) attributes {dimension_semantics = [#tpu.dimension_semantics<parallel>], iteration_bounds = array<i64: 1>, scalar_prefetch = 0 : i64, scratch_operands = 0 : i64, tpu.core_type = #tpu.core_type<tc>, window_params = [{transform_indices = @transform_0, window_bounds = array<i64: 8, 128>}, {pipeline_mode = #tpu.pipeline_mode<synchronous>, transform_indices = @transform_1, window_bounds = array<i64: 128, 128>}, {pipeline_mode = #tpu.pipeline_mode<synchronous>, transform_indices = @transform_2, window_bounds = array<i64: 1, 128>}, {pipeline_mode = #tpu.pipeline_mode<synchronous>, transform_indices = @transform_3, window_bounds = array<i64: 128, 128>}, {transform_indices = @transform_4, window_bounds = array<i64: 8, 128>}]} {
    %c0 = arith.constant 0 : index
    %c0_0 = arith.constant 0 : index
    %0 = vector.load %arg1[%c0, %c0_0] : memref<8x128xf32, #tpu.memory_space<vmem>>, vector<8x128xf32>
    %c0_1 = arith.constant 0 : index
    %c0_2 = arith.constant 0 : index
    %1 = vector.load %arg2[%c0_1, %c0_2] : memref<128x128xf32, #tpu.memory_space<vmem>>, vector<128x128xf32>
    %cst = arith.constant dense<0.000000e+00> : vector<8x128xf32>
    %2 = tpu.matmul %0, %1, %cst {dimension_numbers = #tpu.dot_dimension_numbers<[1], [0], [0], [1], [0, 0, 1, 1], [], []>} : vector<8x128xf32>, vector<128x128xf32>, vector<8x128xf32> -> vector<8x128xf32>
    %c0_3 = arith.constant 0 : index
    %c0_4 = arith.constant 0 : index
    %3 = vector.load %arg3[%c0_3, %c0_4] : memref<1x128xf32, #tpu.memory_space<vmem>>, vector<1x128xf32>
    %4 = vector.broadcast %3 : vector<1x128xf32> to vector<8x128xf32>
    %5 = arith.addf %2, %4 : vector<8x128xf32>
    %cst_5 = arith.constant 0.000000e+00 : f32
    %6 = vector.broadcast %cst_5 : f32 to vector<8x128xf32>
    %7 = arith.maximumf %5, %6 : vector<8x128xf32>
    %c0_6 = arith.constant 0 : index
    %c0_7 = arith.constant 0 : index
    %8 = vector.load %arg4[%c0_6, %c0_7] : memref<128x128xf32, #tpu.memory_space<vmem>>, vector<128x128xf32>
    %cst_8 = arith.constant dense<0.000000e+00> : vector<8x128xf32>
    %9 = tpu.matmul %7, %8, %cst_8 {dimension_numbers = #tpu.dot_dimension_numbers<[1], [0], [0], [1], [0, 0, 1, 1], [], []>} : vector<8x128xf32>, vector<128x128xf32>, vector<8x128xf32> -> vector<8x128xf32>
    %10 = arith.addf %9, %0 : vector<8x128xf32>
    %c0_9 = arith.constant 0 : index
    %c0_10 = arith.constant 0 : index
    %11 = vector.load %arg5[%c0_9, %c0_10] : memref<8x128xf32, #tpu.memory_space<vmem>>, vector<8x128xf32>
    tpu.vector_store %arg5[%c0_9, %c0_10], %10 {strides = array<i32>} : memref<8x128xf32, #tpu.memory_space<vmem>>, vector<8x128xf32>,
    return
  }
  func.func @transform_0(%arg0: i32) -> (i32, i32) {
    %c0_i32 = arith.constant 0 : i32
    %c0_i32_0 = arith.constant 0 : i32
    return %arg0, %c0_i32 : i32, i32
  }
  func.func @transform_1(%arg0: i32) -> (i32, i32) {
    %c0_i32 = arith.constant 0 : i32
    %c0_i32_0 = arith.constant 0 : i32
    %c0_i32_1 = arith.constant 0 : i32
    return %c0_i32, %c0_i32_0 : i32, i32
  }
  func.func @transform_2(%arg0: i32) -> (i32, i32) {
    %c0_i32 = arith.constant 0 : i32
    %c0_i32_0 = arith.constant 0 : i32
    %c0_i32_1 = arith.constant 0 : i32
    return %c0_i32, %c0_i32_0 : i32, i32
  }
  func.func @transform_3(%arg0: i32) -> (i32, i32) {
    %c0_i32 = arith.constant 0 : i32
    %c0_i32_0 = arith.constant 0 : i32
    %c0_i32_1 = arith.constant 0 : i32
    return %c0_i32, %c0_i32_0 : i32, i32
  }
  func.func @transform_4(%arg0: i32) -> (i32, i32) {
    %c0_i32 = arith.constant 0 : i32
    %c0_i32_0 = arith.constant 0 : i32
    return %arg0, %c0_i32 : i32, i32
  }
}

module attributes {stable_mosaic.version = 11 : i64} {
  func.func @_block_kernel_residual(%arg0: i32, %arg1: memref<8x128xf32, #tpu.memory_space<vmem>>, %arg2: memref<128x128xf32, #tpu.memory_space<vmem>>, %arg3: memref<1x128xf32, #tpu.memory_space<vmem>>, %arg4: memref<128x128xf32, #tpu.memory_space<vmem>>, %arg5: memref<8x128xf32, #tpu.memory_space<vmem>>) attributes {dimension_semantics = [#tpu.dimension_semantics<parallel>], iteration_bounds = array<i64: 1>, scalar_prefetch = 0 : i64, scratch_operands = 0 : i64, tpu.core_type = #tpu.core_type<tc>, window_params = [{transform_indices = @transform_0, window_bounds = array<i64: 8, 128>}, {pipeline_mode = #tpu.pipeline_mode<synchronous>, transform_indices = @transform_1, window_bounds = array<i64: 128, 128>}, {pipeline_mode = #tpu.pipeline_mode<synchronous>, transform_indices = @transform_2, window_bounds = array<i64: 1, 128>}, {pipeline_mode = #tpu.pipeline_mode<synchronous>, transform_indices = @transform_3, window_bounds = array<i64: 128, 128>}, {transform_indices = @transform_4, window_bounds = array<i64: 8, 128>}]} {
    %c0 = arith.constant 0 : index
    %c0_0 = arith.constant 0 : index
    %0 = vector.load %arg1[%c0, %c0_0] : memref<8x128xf32, #tpu.memory_space<vmem>>, vector<8x128xf32>
    %c0_1 = arith.constant 0 : index
    %c0_2 = arith.constant 0 : index
    %1 = vector.load %arg2[%c0_1, %c0_2] : memref<128x128xf32, #tpu.memory_space<vmem>>, vector<128x128xf32>
    %cst = arith.constant dense<0.000000e+00> : vector<8x128xf32>
    %2 = tpu.matmul %0, %1, %cst {dimension_numbers = #tpu.dot_dimension_numbers<[1], [0], [0], [1], [0, 0, 1, 1], [], []>} : vector<8x128xf32>, vector<128x128xf32>, vector<8x128xf32> -> vector<8x128xf32>
    %c0_3 = arith.constant 0 : index
    %c0_4 = arith.constant 0 : index
    %3 = vector.load %arg3[%c0_3, %c0_4] : memref<1x128xf32, #tpu.memory_space<vmem>>, vector<1x128xf32>
    %4 = vector.broadcast %3 : vector<1x128xf32> to vector<8x128xf32>
    %5 = arith.addf %2, %4 : vector<8x128xf32>
    %cst_5 = arith.constant 0.000000e+00 : f32
    %6 = vector.broadcast %cst_5 : f32 to vector<8x128xf32>
    %7 = arith.maximumf %5, %6 : vector<8x128xf32>
    %c0_6 = arith.constant 0 : index
    %c0_7 = arith.constant 0 : index
    %8 = vector.load %arg4[%c0_6, %c0_7] : memref<128x128xf32, #tpu.memory_space<vmem>>, vector<128x128xf32>
    %cst_8 = arith.constant dense<0.000000e+00> : vector<8x128xf32>
    %9 = tpu.matmul %7, %8, %cst_8 {dimension_numbers = #tpu.dot_dimension_numbers<[1], [0], [0], [1], [0, 0, 1, 1], [], []>} : vector<8x128xf32>, vector<128x128xf32>, vector<8x128xf32> -> vector<8x128xf32>
    %10 = arith.addf %9, %0 : vector<8x128xf32>
    %c0_9 = arith.constant 0 : index
    %c0_10 = arith.constant 0 : index
    %11 = vector.load %arg5[%c0_9, %c0_10] : memref<8x128xf32, #tpu.memory_space<vmem>>, vector<8x128xf32>
    tpu.vector_store %arg5[%c0_9, %c0_10], %10 {strides = array<i32>} : memref<8x128xf32, #tpu.memory_space<vmem>>, vector<8x128xf32>,
    return
  }
  func.func @transform_0(%arg0: i32) -> (i32, i32) {
    %c0_i32 = arith.constant 0 : i32
    %c0_i32_0 = arith.constant 0 : i32
    return %arg0, %c0_i32 : i32, i32
  }
  func.func @transform_1(%arg0: i32) -> (i32, i32) {
    %c0_i32 = arith.constant 0 : i32
    %c0_i32_0 = arith.constant 0 : i32
    %c0_i32_1 = arith.constant 0 : i32
    return %c0_i32, %c0_i32_0 : i32, i32
  }
  func.func @transform_2(%arg0: i32) -> (i32, i32) {
    %c0_i32 = arith.constant 0 : i32
    %c0_i32_0 = arith.constant 0 : i32
    %c0_i32_1 = arith.constant 0 : i32
    return %c0_i32, %c0_i32_0 : i32, i32
  }
  func.func @transform_3(%arg0: i32) -> (i32, i32) {
    %c0_i32 = arith.constant 0 : i32
    %c0_i32_0 = arith.constant 0 : i32
    %c0_i32_1 = arith.constant 0 : i32
    return %c0_i32, %c0_i32_0 : i32, i32
  }
  func.func @transform_4(%arg0: i32) -> (i32, i32) {
    %c0_i32 = arith.constant 0 : i32
    %c0_i32_0 = arith.constant 0 : i32
    return %arg0, %c0_i32 : i32, i32
  }
}

</mosaic_0001>

<llo_original>
// kernel: tpu_custom_call.1
$region0: #{tpu_custom_call.1}
  #allocation0 [shape = 'u32[]', space=smem, size = 0x4, offset = 0x4, fixed_abs, tag = 'smem constant byte address 0x4 - core index']
  #allocation1 [shape = 'u32[144,128]{1,0:T(1,128)}', space=vmem, size = 0x12000, scoped, tag = 'internal scratch']
  %s0 = inlined_call_operand.hbm [shape: f32[8,128], index: 0, kind: input, shape index: {}]
  %s1 = inlined_call_operand.hbm [shape: f32[128,128], index: 1, kind: input, shape index: {}]
  %s2 = inlined_call_operand.vmem [shape: f32[1,128], index: 2, kind: input, shape index: {}]
  %s3 = inlined_call_operand.hbm [shape: f32[128,128], index: 3, kind: input, shape index: {}]
  %s4 = inlined_call_operand.hbm [shape: f32[8,128], index: 4, kind: output, shape index: {}]
  %s5 = sld [smem:[#allocation0]]
  $region38: #{tpu_custom_call.1} parent=0
    _
  %s7 = ssub.s32 1, %s5
  %s8 = scalar_select 0, %s7, %s5
  $region1: #{tpu_custom_call.1} parent=0
    #allocation2 [shape = 'u8[4096]{0}', space=vmem, size = 0x1000, scoped, tag = 'input window, operand 0, single buffered']
    #allocation3 [shape = 's32[1]{0}', space=sflag, size = 0x4, scoped, tag = 'scoped memory for tpu_custom_call.1']
    #allocation4 [shape = 's32[1]{0}', space=sflag, size = 0x4, scoped, tag = 'scoped memory for tpu_custom_call.1']
    #allocation5 [shape = 'u8[65536]{0}', space=vmem, size = 0x10000, scoped, tag = 'input window, operand 1, single buffered']
    #allocation6 [shape = 's32[1]{0}', space=sflag, size = 0x4, scoped, tag = 'scoped memory for tpu_custom_call.1']
    #allocation7 [shape = 'u8[65536]{0}', space=vmem, size = 0x10000, scoped, tag = 'input window, operand 3, single buffered']
    #allocation8 [shape = 'u8[4096]{0}', space=vmem, size = 0x1000, scoped, tag = 'output window, operand 0, single buffered']
    %9 = vsyncpa [#allocation3], 0
    %10 = vsyncpa [#allocation6], 0
    %11 = vsyncpa [#allocation4], 0
    // Predicated region
    $region2: #{tpu_custom_call.1} parent=1 // pred_check
      _
    $region3: #{tpu_custom_call.1} parent=1 // pred_check_branch
      %13 = sbr.rel (0) target = $region5
    $region4: #{tpu_custom_call.1} parent=1 // pred_region
      %s15 = ssub.s32 128, 128
      %16 = vsyncadd [#allocation3], %s15
      %s18 = sshll.u32 [#allocation2], 4
      %s19 = int_to_ptr.vmem [resolvable:$true] %s18
      %21 = dma.hbm_to_vmem [thread:$0]  %s0, 128, %s19, [#allocation3]
    $region5: #{tpu_custom_call.1} parent=1 // pred_fallthru
      _
    // Predicated region
    $region6: #{tpu_custom_call.1} parent=1 // pred_check
      _
    $region7: #{tpu_custom_call.1} parent=1 // pred_check_branch
      %23 = sbr.rel (0) target = $region9
    $region8: #{tpu_custom_call.1} parent=1 // pred_region
      %s25 = ssub.s32 2048, 2048
      %26 = vsyncadd [#allocation6], %s25
      %s27 = sshll.u32 [#allocation5], 4
      %s28 = int_to_ptr.vmem [resolvable:$true] %s27
      %33 = dma.hbm_to_vmem [thread:$0]  %s1, 2048, %s28, [#allocation6], 128, 128, 8
    $region9: #{tpu_custom_call.1} parent=1 // pred_fallthru
      _
    // Predicated region
    $region10: #{tpu_custom_call.1} parent=1 // pred_check
      _
    $region11: #{tpu_custom_call.1} parent=1 // pred_check_branch
      %35 = sbr.rel (0) target = $region13
    $region12: #{tpu_custom_call.1} parent=1 // pred_region
      _
    $region13: #{tpu_custom_call.1} parent=1 // pred_fallthru
      _
    // Predicated region
    $region14: #{tpu_custom_call.1} parent=1 // pred_check
      _
    $region15: #{tpu_custom_call.1} parent=1 // pred_check_branch
      %37 = sbr.rel (0) target = $region17
    $region16: #{tpu_custom_call.1} parent=1 // pred_region
      %s39 = ssub.s32 2048, 2048
      %40 = vsyncadd [#allocation6], %s39
      %s41 = sshll.u32 [#allocation7], 4
      %s42 = int_to_ptr.vmem [resolvable:$true] %s41
      %47 = dma.hbm_to_vmem [thread:$0]  %s3, 2048, %s42, [#allocation6], 128, 128, 8
    $region17: #{tpu_custom_call.1} parent=1 // pred_fallthru
      _
    // Predicated region
    $region18: #{tpu_custom_call.1} parent=1 // pred_check
      _
    $region19: #{tpu_custom_call.1} parent=1 // pred_check_branch
      %49 = sbr.rel (0) target = $region21
    $region20: #{tpu_custom_call.1} parent=1 // pred_region
      %50 = dma.done [#allocation3], 128
    $region21: #{tpu_custom_call.1} parent=1 // pred_fallthru
      _
    // Predicated region
    $region22: #{tpu_custom_call.1} parent=1 // pred_check
      _
    $region23: #{tpu_custom_call.1} parent=1 // pred_check_branch
      %52 = sbr.rel (0) target = $region25
    $region24: #{tpu_custom_call.1} parent=1 // pred_region
      %53 = dma.done [#allocation6], 2048
    $region25: #{tpu_custom_call.1} parent=1 // pred_fallthru
      _
    // Predicated region
    $region26: #{tpu_custom_call.1} parent=1 // pred_check
      _
    $region27: #{tpu_custom_call.1} parent=1 // pred_check_branch
      %55 = sbr.rel (0) target = $region29
    $region28: #{tpu_custom_call.1} parent=1 // pred_region
      %56 = dma.done [#allocation6], 2048
    $region29: #{tpu_custom_call.1} parent=1 // pred_fallthru
      _
    %v57 = vld [vmem:[#allocation2] sm:$0xff]
    %v58 = vld [vmem:[#allocation5] sm:$0xff]
    %v59 = vld [vmem:[#allocation5 + $0x8] sm:$0xff]
    %v60 = vld [vmem:[#allocation5 + $0x10] sm:$0xff]
    %v61 = vld [vmem:[#allocation5 + $0x18] sm:$0xff]
    %v62 = vld [vmem:[#allocation5 + $0x20] sm:$0xff]
    %v63 = vld [vmem:[#allocation5 + $0x28] sm:$0xff]
    %v64 = vld [vmem:[#allocation5 + $0x30] sm:$0xff]
    %v65 = vld [vmem:[#allocation5 + $0x38] sm:$0xff]
    %v66 = vld [vmem:[#allocation5 + $0x40] sm:$0xff]
    %v67 = vld [vmem:[#allocation5 + $0x48] sm:$0xff]
    %v68 = vld [vmem:[#allocation5 + $0x50] sm:$0xff]
    %v69 = vld [vmem:[#allocation5 + $0x58] sm:$0xff]
    %v70 = vld [vmem:[#allocation5 + $0x60] sm:$0xff]
    %v71 = vld [vmem:[#allocation5 + $0x68] sm:$0xff]
    %v72 = vld [vmem:[#allocation5 + $0x70] sm:$0xff]
    %v73 = vld [vmem:[#allocation5 + $0x78] sm:$0xff]
    %v74 = vld [vmem:[%s2] sm:$0x1]
    %v76 = vlaneseq
    %v77 = vshrl.u32 %v76, 7
    %v78 = vsub.s32 0, %v77
    %v79 = vrot.slane %v74, %v78
    %81 = vmatprep.subr.mxu0 0.0
    %82 = vmatpush1.msra.mxu0 %v73
    %83 = vmatprep.subr.mxu0 0.0
    %84 = vmatpush1.msra.mxu0 %v72
    %85 = vmatprep.subr.mxu0 0.0
    %86 = vmatpush1.msra.mxu0 %v71
    %87 = vmatprep.subr.mxu0 0.0
    %88 = vmatpush1.msra.mxu0 %v70
    %89 = vmatprep.subr.mxu0 0.0
    %90 = vmatpush1.msra.mxu0 %v69
    %91 = vmatprep.subr.mxu0 0.0
    %92 = vmatpush1.msra.mxu0 %v68
    %93 = vmatprep.subr.mxu0 0.0
    %94 = vmatpush1.msra.mxu0 %v67
    %95 = vmatprep.subr.mxu0 0.0
    %96 = vmatpush1.msra.mxu0 %v66
    %97 = vmatprep.subr.mxu0 0.0
    %98 = vmatpush1.msra.mxu0 %v65
    %99 = vmatprep.subr.mxu0 0.0
    %100 = vmatpush1.msra.mxu0 %v64
    %101 = vmatprep.subr.mxu0 0.0
    %102 = vmatpush1.msra.mxu0 %v63
    %103 = vmatprep.subr.mxu0 0.0
    %104 = vmatpush1.msra.mxu0 %v62
    %105 = vmatprep.subr.mxu0 0.0
    %106 = vmatpush1.msra.mxu0 %v61
    %107 = vmatprep.subr.mxu0 0.0
    %108 = vmatpush1.msra.mxu0 %v60
    %109 = vmatprep.subr.mxu0 0.0
    %110 = vmatpush1.msra.mxu0 %v59
    %111 = vmatprep.subr.mxu0 0.0
    %112 = vmatpush1.msra.mxu0 %v58
    %113 = vmatprep.subr.mxu0 0.0
    %114 = vmatpush2.msra.mxu0 0.0
    %115 = vmatprep.subr.mxu0 0.0
    %116 = vmatpush2.msra.mxu0 0.0
    %117 = vmatprep.subr.mxu0 0.0
    %118 = vmatpush2.msra.mxu0 0.0
    %119 = vmatprep.subr.mxu0 0.0
    %120 = vmatpush2.msra.mxu0 0.0
    %121 = vmatprep.subr.mxu0 0.0
    %122 = vmatpush2.msra.mxu0 0.0
    %123 = vmatprep.subr.mxu0 0.0
    %124 = vmatpush2.msra.mxu0 0.0
    %125 = vmatprep.subr.mxu0 0.0
    %126 = vmatpush2.msra.mxu0 0.0
    %127 = vmatprep.subr.mxu0 0.0
    %128 = vmatpush2.msra.mxu0 0.0
    %129 = vmatprep.subr.mxu0 0.0
    %130 = vmatpush2.msra.mxu0 0.0
    %131 = vmatprep.subr.mxu0 0.0
    %132 = vmatpush2.msra.mxu0 0.0
    %133 = vmatprep.subr.mxu0 0.0
    %134 = vmatpush2.msra.mxu0 0.0
    %135 = vmatprep.subr.mxu0 0.0
    %136 = vmatpush2.msra.mxu0 0.0
    %137 = vmatprep.subr.mxu0 0.0
    %138 = vmatpush2.msra.mxu0 0.0
    %139 = vmatprep.subr.mxu0 0.0
    %140 = vmatpush2.msra.mxu0 0.0
    %141 = vmatprep.subr.mxu0 0.0
    %142 = vmatpush2.msra.mxu0 0.0
    %143 = vmatprep.subr.mxu0 0.0
    %144 = vmatpush2.msra.mxu0 0.0
    %145 = vmatprep.mubr.f32.mxu0 0.0
    %146 = vmatmul.mubr.f32.gmra.mxu0 %v57
    %v147 = vpop.f32.mrf.mxu0
    %v148 = vadd.f32 %v79, %v147
    %v149 = vpop.f32.mrf.mxu0
    %150 = vdwg.mxu0
    %v151 = vmax.f32 %v148, 0.0
    %v152 = vld [vmem:[#allocation7] sm:$0xff]
    %v153 = vld [vmem:[#allocation7 + $0x8] sm:$0xff]
    %v154 = vld [vmem:[#allocation7 + $0x10] sm:$0xff]
    %v155 = vld [vmem:[#allocation7 + $0x18] sm:$0xff]
    %v156 = vld [vmem:[#allocation7 + $0x20] sm:$0xff]
    %v157 = vld [vmem:[#allocation7 + $0x28] sm:$0xff]
    %v158 = vld [vmem:[#allocation7 + $0x30] sm:$0xff]
    %v159 = vld [vmem:[#allocation7 + $0x38] sm:$0xff]
    %v160 = vld [vmem:[#allocation7 + $0x40] sm:$0xff]
    %v161 = vld [vmem:[#allocation7 + $0x48] sm:$0xff]
    %v162 = vld [vmem:[#allocation7 + $0x50] sm:$0xff]
    %v163 = vld [vmem:[#allocation7 + $0x58] sm:$0xff]
    %v164 = vld [vmem:[#allocation7 + $0x60] sm:$0xff]
    %v165 = vld [vmem:[#allocation7 + $0x68] sm:$0xff]
    %v166 = vld [vmem:[#allocation7 + $0x70] sm:$0xff]
    %v167 = vld [vmem:[#allocation7 + $0x78] sm:$0xff]
    %168 = vmatprep.subr.mxu0 0.0
    %169 = vmatpush1.msra.mxu0 %v167
    %170 = vmatprep.subr.mxu0 0.0
    %171 = vmatpush1.msra.mxu0 %v166
    %172 = vmatprep.subr.mxu0 0.0
    %173 = vmatpush1.msra.mxu0 %v165
    %174 = vmatprep.subr.mxu0 0.0
    %175 = vmatpush1.msra.mxu0 %v164
    %176 = vmatprep.subr.mxu0 0.0
    %177 = vmatpush1.msra.mxu0 %v163
    %178 = vmatprep.subr.mxu0 0.0
    %179 = vmatpush1.msra.mxu0 %v162
    %180 = vmatprep.subr.mxu0 0.0
    %181 = vmatpush1.msra.mxu0 %v161
    %182 = vmatprep.subr.mxu0 0.0
    %183 = vmatpush1.msra.mxu0 %v160
    %184 = vmatprep.subr.mxu0 0.0
    %185 = vmatpush1.msra.mxu0 %v159
    %186 = vmatprep.subr.mxu0 0.0
    %187 = vmatpush1.msra.mxu0 %v158
    %188 = vmatprep.subr.mxu0 0.0
    %189 = vmatpush1.msra.mxu0 %v157
    %190 = vmatprep.subr.mxu0 0.0
    %191 = vmatpush1.msra.mxu0 %v156
    %192 = vmatprep.subr.mxu0 0.0
    %193 = vmatpush1.msra.mxu0 %v155
    %194 = vmatprep.subr.mxu0 0.0
    %195 = vmatpush1.msra.mxu0 %v154
    %196 = vmatprep.subr.mxu0 0.0
    %197 = vmatpush1.msra.mxu0 %v153
    %198 = vmatprep.subr.mxu0 0.0
    %199 = vmatpush1.msra.mxu0 %v152
    %200 = vmatprep.subr.mxu0 0.0
    %201 = vmatpush2.msra.mxu0 0.0
    %202 = vmatprep.subr.mxu0 0.0
    %203 = vmatpush2.msra.mxu0 0.0
    %204 = vmatprep.subr.mxu0 0.0
    %205 = vmatpush2.msra.mxu0 0.0
    %206 = vmatprep.subr.mxu0 0.0
    %207 = vmatpush2.msra.mxu0 0.0
    %208 = vmatprep.subr.mxu0 0.0
    %209 = vmatpush2.msra.mxu0 0.0
    %210 = vmatprep.subr.mxu0 0.0
    %211 = vmatpush2.msra.mxu0 0.0
    %212 = vmatprep.subr.mxu0 0.0
    %213 = vmatpush2.msra.mxu0 0.0
    %214 = vmatprep.subr.mxu0 0.0
    %215 = vmatpush2.msra.mxu0 0.0
    %216 = vmatprep.subr.mxu0 0.0
    %217 = vmatpush2.msra.mxu0 0.0
    %218 = vmatprep.subr.mxu0 0.0
    %219 = vmatpush2.msra.mxu0 0.0
    %220 = vmatprep.subr.mxu0 0.0
    %221 = vmatpush2.msra.mxu0 0.0
    %222 = vmatprep.subr.mxu0 0.0
    %223 = vmatpush2.msra.mxu0 0.0
    %224 = vmatprep.subr.mxu0 0.0
    %225 = vmatpush2.msra.mxu0 0.0
    %226 = vmatprep.subr.mxu0 0.0
    %227 = vmatpush2.msra.mxu0 0.0
    %228 = vmatprep.subr.mxu0 0.0
    %229 = vmatpush2.msra.mxu0 0.0
    %230 = vmatprep.subr.mxu0 0.0
    %231 = vmatpush2.msra.mxu0 0.0
    %232 = vmatprep.mubr.f32.mxu0 0.0
    %233 = vmatmul.mubr.f32.gmra.mxu0 %v151
    %v234 = vpop.f32.mrf.mxu0
    %v235 = vadd.f32 %v57, %v234
    %v236 = vpop.f32.mrf.mxu0
    %237 = vdwg.mxu0
    %238 = vst [vmem:[#allocation8] sm:$0xff] %v235
    // Predicated region
    $region30: #{tpu_custom_call.1} parent=1 // pred_check
      _
    $region31: #{tpu_custom_call.1} parent=1 // pred_check_branch
      %240 = sbr.rel (0) target = $region33
    $region32: #{tpu_custom_call.1} parent=1 // pred_region
      %s242 = ssub.s32 128, 128
      %243 = vsyncadd [#allocation4], %s242
      %s245 = sshll.u32 [#allocation8], 4
      %s246 = int_to_ptr.vmem [resolvable:$true] %s245
      %248 = dma.vmem_to_hbm [thread:$0]  %s246, 128, %s4, [#allocation4]
    $region33: #{tpu_custom_call.1} parent=1 // pred_fallthru
      _
    // Predicated region
    $region34: #{tpu_custom_call.1} parent=1 // pred_check
      _
    $region35: #{tpu_custom_call.1} parent=1 // pred_check_branch
      %250 = sbr.rel (0) target = $region37
    $region36: #{tpu_custom_call.1} parent=1 // pred_region
      %251 = dma.done [#allocation4], 128
    $region37: #{tpu_custom_call.1} parent=1 // pred_fallthru
      _
    %252 = vsyncpa [#allocation3], 1
    %253 = vsyncpa [#allocation6], 1
    %254 = vsyncpa [#allocation4], 1

// kernel: tpu_custom_call.1
$region0: #{tpu_custom_call.1}
  #allocation0 [shape = 'u32[]', space=smem, size = 0x4, offset = 0x4, fixed_abs, tag = 'smem constant byte address 0x4 - core index']
  #allocation1 [shape = 'u32[144,128]{1,0:T(1,128)}', space=vmem, size = 0x12000, scoped, tag = 'internal scratch']
  %s0 = inlined_call_operand.hbm [shape: f32[8,128], index: 0, kind: input, shape index: {}]
  %s1 = inlined_call_operand.hbm [shape: f32[128,128], index: 1, kind: input, shape index: {}]
  %s2 = inlined_call_operand.vmem [shape: f32[1,128], index: 2, kind: input, shape index: {}]
  %s3 = inlined_call_operand.hbm [shape: f32[128,128], index: 3, kind: input, shape index: {}]
  %s4 = inlined_call_operand.hbm [shape: f32[8,128], index: 4, kind: output, shape index: {}]
  %s5 = sld [smem:[#allocation0]]
  $region38: #{tpu_custom_call.1} parent=0
    _
  %s7 = ssub.s32 1, %s5
  %s8 = scalar_select 0, %s7, %s5
  $region1: #{tpu_custom_call.1} parent=0
    #allocation2 [shape = 'u8[4096]{0}', space=vmem, size = 0x1000, scoped, tag = 'input window, operand 0, single buffered']
    #allocation3 [shape = 's32[1]{0}', space=sflag, size = 0x4, scoped, tag = 'scoped memory for tpu_custom_call.1']
    #allocation4 [shape = 's32[1]{0}', space=sflag, size = 0x4, scoped, tag = 'scoped memory for tpu_custom_call.1']
    #allocation5 [shape = 'u8[65536]{0}', space=vmem, size = 0x10000, scoped, tag = 'input window, operand 1, single buffered']
    #allocation6 [shape = 's32[1]{0}', space=sflag, size = 0x4, scoped, tag = 'scoped memory for tpu_custom_call.1']
    #allocation7 [shape = 'u8[65536]{0}', space=vmem, size = 0x10000, scoped, tag = 'input window, operand 3, single buffered']
    #allocation8 [shape = 'u8[4096]{0}', space=vmem, size = 0x1000, scoped, tag = 'output window, operand 0, single buffered']
    %9 = vsyncpa [#allocation3], 0
    %10 = vsyncpa [#allocation6], 0
    %11 = vsyncpa [#allocation4], 0
    // Predicated region
    $region2: #{tpu_custom_call.1} parent=1 // pred_check
      _
    $region3: #{tpu_custom_call.1} parent=1 // pred_check_branch
      %13 = sbr.rel (0) target = $region5
    $region4: #{tpu_custom_call.1} parent=1 // pred_region
      %s15 = ssub.s32 128, 128
      %16 = vsyncadd [#allocation3], %s15
      %s18 = sshll.u32 [#allocation2], 4
      %s19 = int_to_ptr.vmem [resolvable:$true] %s18
      %21 = dma.hbm_to_vmem [thread:$0]  %s0, 128, %s19, [#allocation3]
    $region5: #{tpu_custom_call.1} parent=1 // pred_fallthru
      _
    // Predicated region
    $region6: #{tpu_custom_call.1} parent=1 // pred_check
      _
    $region7: #{tpu_custom_call.1} parent=1 // pred_check_branch
      %23 = sbr.rel (0) target = $region9
    $region8: #{tpu_custom_call.1} parent=1 // pred_region
      %s25 = ssub.s32 2048, 2048
      %26 = vsyncadd [#allocation6], %s25
      %s27 = sshll.u32 [#allocation5], 4
      %s28 = int_to_ptr.vmem [resolvable:$true] %s27
      %33 = dma.hbm_to_vmem [thread:$0]  %s1, 2048, %s28, [#allocation6], 128, 128, 8
    $region9: #{tpu_custom_call.1} parent=1 // pred_fallthru
      _
    // Predicated region
    $region10: #{tpu_custom_call.1} parent=1 // pred_check
      _
    $region11: #{tpu_custom_call.1} parent=1 // pred_check_branch
      %35 = sbr.rel (0) target = $region13
    $region12: #{tpu_custom_call.1} parent=1 // pred_region
      _
    $region13: #{tpu_custom_call.1} parent=1 // pred_fallthru
      _
    // Predicated region
    $region14: #{tpu_custom_call.1} parent=1 // pred_check
      _
    $region15: #{tpu_custom_call.1} parent=1 // pred_check_branch
      %37 = sbr.rel (0) target = $region17
    $region16: #{tpu_custom_call.1} parent=1 // pred_region
      %s39 = ssub.s32 2048, 2048
      %40 = vsyncadd [#allocation6], %s39
      %s41 = sshll.u32 [#allocation7], 4
      %s42 = int_to_ptr.vmem [resolvable:$true] %s41
      %47 = dma.hbm_to_vmem [thread:$0]  %s3, 2048, %s42, [#allocation6], 128, 128, 8
    $region17: #{tpu_custom_call.1} parent=1 // pred_fallthru
      _
    // Predicated region
    $region18: #{tpu_custom_call.1} parent=1 // pred_check
      _
    $region19: #{tpu_custom_call.1} parent=1 // pred_check_branch
      %49 = sbr.rel (0) target = $region21
    $region20: #{tpu_custom_call.1} parent=1 // pred_region
      %50 = dma.done [#allocation3], 128
    $region21: #{tpu_custom_call.1} parent=1 // pred_fallthru
      _
    // Predicated region
    $region22: #{tpu_custom_call.1} parent=1 // pred_check
      _
    $region23: #{tpu_custom_call.1} parent=1 // pred_check_branch
      %52 = sbr.rel (0) target = $region25
    $region24: #{tpu_custom_call.1} parent=1 // pred_region
      %53 = dma.done [#allocation6], 2048
    $region25: #{tpu_custom_call.1} parent=1 // pred_fallthru
      _
    // Predicated region
    $region26: #{tpu_custom_call.1} parent=1 // pred_check
      _
    $region27: #{tpu_custom_call.1} parent=1 // pred_check_branch
      %55 = sbr.rel (0) target = $region29
    $region28: #{tpu_custom_call.1} parent=1 // pred_region
      %56 = dma.done [#allocation6], 2048
    $region29: #{tpu_custom_call.1} parent=1 // pred_fallthru
      _
    %v57 = vld [vmem:[#allocation2] sm:$0xff]
    %v58 = vld [vmem:[#allocation5] sm:$0xff]
    %v59 = vld [vmem:[#allocation5 + $0x8] sm:$0xff]
    %v60 = vld [vmem:[#allocation5 + $0x10] sm:$0xff]
    %v61 = vld [vmem:[#allocation5 + $0x18] sm:$0xff]
    %v62 = vld [vmem:[#allocation5 + $0x20] sm:$0xff]
    %v63 = vld [vmem:[#allocation5 + $0x28] sm:$0xff]
    %v64 = vld [vmem:[#allocation5 + $0x30] sm:$0xff]
    %v65 = vld [vmem:[#allocation5 + $0x38] sm:$0xff]
    %v66 = vld [vmem:[#allocation5 + $0x40] sm:$0xff]
    %v67 = vld [vmem:[#allocation5 + $0x48] sm:$0xff]
    %v68 = vld [vmem:[#allocation5 + $0x50] sm:$0xff]
    %v69 = vld [vmem:[#allocation5 + $0x58] sm:$0xff]
    %v70 = vld [vmem:[#allocation5 + $0x60] sm:$0xff]
    %v71 = vld [vmem:[#allocation5 + $0x68] sm:$0xff]
    %v72 = vld [vmem:[#allocation5 + $0x70] sm:$0xff]
    %v73 = vld [vmem:[#allocation5 + $0x78] sm:$0xff]
    %v74 = vld [vmem:[%s2] sm:$0x1]
    %v76 = vlaneseq
    %v77 = vshrl.u32 %v76, 7
    %v78 = vsub.s32 0, %v77
    %v79 = vrot.slane %v74, %v78
    %81 = vmatprep.subr.mxu0 0.0
    %82 = vmatpush1.msra.mxu0 %v73
    %83 = vmatprep.subr.mxu0 0.0
    %84 = vmatpush1.msra.mxu0 %v72
    %85 = vmatprep.subr.mxu0 0.0
    %86 = vmatpush1.msra.mxu0 %v71
    %87 = vmatprep.subr.mxu0 0.0
    %88 = vmatpush1.msra.mxu0 %v70
    %89 = vmatprep.subr.mxu0 0.0
    %90 = vmatpush1.msra.mxu0 %v69
    %91 = vmatprep.subr.mxu0 0.0
    %92 = vmatpush1.msra.mxu0 %v68
    %93 = vmatprep.subr.mxu0 0.0
    %94 = vmatpush1.msra.mxu0 %v67
    %95 = vmatprep.subr.mxu0 0.0
    %96 = vmatpush1.msra.mxu0 %v66
    %97 = vmatprep.subr.mxu0 0.0
    %98 = vmatpush1.msra.mxu0 %v65
    %99 = vmatprep.subr.mxu0 0.0
    %100 = vmatpush1.msra.mxu0 %v64
    %101 = vmatprep.subr.mxu0 0.0
    %102 = vmatpush1.msra.mxu0 %v63
    %103 = vmatprep.subr.mxu0 0.0
    %104 = vmatpush1.msra.mxu0 %v62
    %105 = vmatprep.subr.mxu0 0.0
    %106 = vmatpush1.msra.mxu0 %v61
    %107 = vmatprep.subr.mxu0 0.0
    %108 = vmatpush1.msra.mxu0 %v60
    %109 = vmatprep.subr.mxu0 0.0
    %110 = vmatpush1.msra.mxu0 %v59
    %111 = vmatprep.subr.mxu0 0.0
    %112 = vmatpush1.msra.mxu0 %v58
    %113 = vmatprep.subr.mxu0 0.0
    %114 = vmatpush2.msra.mxu0 0.0
    %115 = vmatprep.subr.mxu0 0.0
    %116 = vmatpush2.msra.mxu0 0.0
    %117 = vmatprep.subr.mxu0 0.0
    %118 = vmatpush2.msra.mxu0 0.0
    %119 = vmatprep.subr.mxu0 0.0
    %120 = vmatpush2.msra.mxu0 0.0
    %121 = vmatprep.subr.mxu0 0.0
    %122 = vmatpush2.msra.mxu0 0.0
    %123 = vmatprep.subr.mxu0 0.0
    %124 = vmatpush2.msra.mxu0 0.0
    %125 = vmatprep.subr.mxu0 0.0
    %126 = vmatpush2.msra.mxu0 0.0
    %127 = vmatprep.subr.mxu0 0.0
    %128 = vmatpush2.msra.mxu0 0.0
    %129 = vmatprep.subr.mxu0 0.0
    %130 = vmatpush2.msra.mxu0 0.0
    %131 = vmatprep.subr.mxu0 0.0
    %132 = vmatpush2.msra.mxu0 0.0
    %133 = vmatprep.subr.mxu0 0.0
    %134 = vmatpush2.msra.mxu0 0.0
    %135 = vmatprep.subr.mxu0 0.0
    %136 = vmatpush2.msra.mxu0 0.0
    %137 = vmatprep.subr.mxu0 0.0
    %138 = vmatpush2.msra.mxu0 0.0
    %139 = vmatprep.subr.mxu0 0.0
    %140 = vmatpush2.msra.mxu0 0.0
    %141 = vmatprep.subr.mxu0 0.0
    %142 = vmatpush2.msra.mxu0 0.0
    %143 = vmatprep.subr.mxu0 0.0
    %144 = vmatpush2.msra.mxu0 0.0
    %145 = vmatprep.mubr.f32.mxu0 0.0
    %146 = vmatmul.mubr.f32.gmra.mxu0 %v57
    %v147 = vpop.f32.mrf.mxu0
    %v148 = vadd.f32 %v79, %v147
    %v149 = vpop.f32.mrf.mxu0
    %150 = vdwg.mxu0
    %v151 = vmax.f32 %v148, 0.0
    %v152 = vld [vmem:[#allocation7] sm:$0xff]
    %v153 = vld [vmem:[#allocation7 + $0x8] sm:$0xff]
    %v154 = vld [vmem:[#allocation7 + $0x10] sm:$0xff]
    %v155 = vld [vmem:[#allocation7 + $0x18] sm:$0xff]
    %v156 = vld [vmem:[#allocation7 + $0x20] sm:$0xff]
    %v157 = vld [vmem:[#allocation7 + $0x28] sm:$0xff]
    %v158 = vld [vmem:[#allocation7 + $0x30] sm:$0xff]
    %v159 = vld [vmem:[#allocation7 + $0x38] sm:$0xff]
    %v160 = vld [vmem:[#allocation7 + $0x40] sm:$0xff]
    %v161 = vld [vmem:[#allocation7 + $0x48] sm:$0xff]
    %v162 = vld [vmem:[#allocation7 + $0x50] sm:$0xff]
    %v163 = vld [vmem:[#allocation7 + $0x58] sm:$0xff]
    %v164 = vld [vmem:[#allocation7 + $0x60] sm:$0xff]
    %v165 = vld [vmem:[#allocation7 + $0x68] sm:$0xff]
    %v166 = vld [vmem:[#allocation7 + $0x70] sm:$0xff]
    %v167 = vld [vmem:[#allocation7 + $0x78] sm:$0xff]
    %168 = vmatprep.subr.mxu0 0.0
    %169 = vmatpush1.msra.mxu0 %v167
    %170 = vmatprep.subr.mxu0 0.0
    %171 = vmatpush1.msra.mxu0 %v166
    %172 = vmatprep.subr.mxu0 0.0
    %173 = vmatpush1.msra.mxu0 %v165
    %174 = vmatprep.subr.mxu0 0.0
    %175 = vmatpush1.msra.mxu0 %v164
    %176 = vmatprep.subr.mxu0 0.0
    %177 = vmatpush1.msra.mxu0 %v163
    %178 = vmatprep.subr.mxu0 0.0
    %179 = vmatpush1.msra.mxu0 %v162
    %180 = vmatprep.subr.mxu0 0.0
    %181 = vmatpush1.msra.mxu0 %v161
    %182 = vmatprep.subr.mxu0 0.0
    %183 = vmatpush1.msra.mxu0 %v160
    %184 = vmatprep.subr.mxu0 0.0
    %185 = vmatpush1.msra.mxu0 %v159
    %186 = vmatprep.subr.mxu0 0.0
    %187 = vmatpush1.msra.mxu0 %v158
    %188 = vmatprep.subr.mxu0 0.0
    %189 = vmatpush1.msra.mxu0 %v157
    %190 = vmatprep.subr.mxu0 0.0
    %191 = vmatpush1.msra.mxu0 %v156
    %192 = vmatprep.subr.mxu0 0.0
    %193 = vmatpush1.msra.mxu0 %v155
    %194 = vmatprep.subr.mxu0 0.0
    %195 = vmatpush1.msra.mxu0 %v154
    %196 = vmatprep.subr.mxu0 0.0
    %197 = vmatpush1.msra.mxu0 %v153
    %198 = vmatprep.subr.mxu0 0.0
    %199 = vmatpush1.msra.mxu0 %v152
    %200 = vmatprep.subr.mxu0 0.0
    %201 = vmatpush2.msra.mxu0 0.0
    %202 = vmatprep.subr.mxu0 0.0
    %203 = vmatpush2.msra.mxu0 0.0
    %204 = vmatprep.subr.mxu0 0.0
    %205 = vmatpush2.msra.mxu0 0.0
    %206 = vmatprep.subr.mxu0 0.0
    %207 = vmatpush2.msra.mxu0 0.0
    %208 = vmatprep.subr.mxu0 0.0
    %209 = vmatpush2.msra.mxu0 0.0
    %210 = vmatprep.subr.mxu0 0.0
    %211 = vmatpush2.msra.mxu0 0.0
    %212 = vmatprep.subr.mxu0 0.0
    %213 = vmatpush2.msra.mxu0 0.0
    %214 = vmatprep.subr.mxu0 0.0
    %215 = vmatpush2.msra.mxu0 0.0
    %216 = vmatprep.subr.mxu0 0.0
    %217 = vmatpush2.msra.mxu0 0.0
    %218 = vmatprep.subr.mxu0 0.0
    %219 = vmatpush2.msra.mxu0 0.0
    %220 = vmatprep.subr.mxu0 0.0
    %221 = vmatpush2.msra.mxu0 0.0
    %222 = vmatprep.subr.mxu0 0.0
    %223 = vmatpush2.msra.mxu0 0.0
    %224 = vmatprep.subr.mxu0 0.0
    %225 = vmatpush2.msra.mxu0 0.0
    %226 = vmatprep.subr.mxu0 0.0
    %227 = vmatpush2.msra.mxu0 0.0
    %228 = vmatprep.subr.mxu0 0.0
    %229 = vmatpush2.msra.mxu0 0.0
    %230 = vmatprep.subr.mxu0 0.0
    %231 = vmatpush2.msra.mxu0 0.0
    %232 = vmatprep.mubr.f32.mxu0 0.0
    %233 = vmatmul.mubr.f32.gmra.mxu0 %v151
    %v234 = vpop.f32.mrf.mxu0
    %v235 = vadd.f32 %v57, %v234
    %v236 = vpop.f32.mrf.mxu0
    %237 = vdwg.mxu0
    %238 = vst [vmem:[#allocation8] sm:$0xff] %v235
    // Predicated region
    $region30: #{tpu_custom_call.1} parent=1 // pred_check
      _
    $region31: #{tpu_custom_call.1} parent=1 // pred_check_branch
      %240 = sbr.rel (0) target = $region33
    $region32: #{tpu_custom_call.1} parent=1 // pred_region
      %s242 = ssub.s32 128, 128
      %243 = vsyncadd [#allocation4], %s242
      %s245 = sshll.u32 [#allocation8], 4
      %s246 = int_to_ptr.vmem [resolvable:$true] %s245
      %248 = dma.vmem_to_hbm [thread:$0]  %s246, 128, %s4, [#allocation4]
    $region33: #{tpu_custom_call.1} parent=1 // pred_fallthru
      _
    // Predicated region
    $region34: #{tpu_custom_call.1} parent=1 // pred_check
      _
    $region35: #{tpu_custom_call.1} parent=1 // pred_check_branch
      %250 = sbr.rel (0) target = $region37
    $region36: #{tpu_custom_call.1} parent=1 // pred_region
      %251 = dma.done [#allocation4], 128
    $region37: #{tpu_custom_call.1} parent=1 // pred_fallthru
      _
    %252 = vsyncpa [#allocation3], 1
    %253 = vsyncpa [#allocation6], 1
    %254 = vsyncpa [#allocation4], 1

</llo_original>
